<compile_context>
chip_gen: v5e
topology: v5e:2x2
jax: 0.10.0
libtpu: 0.0.40
codegen_flags: <defaults>
</compile_context>

<pallas_src>
import functools

import jax
import jax.numpy as jnp
from jax import lax
from jax.experimental import pallas as pl
from jax.experimental.pallas import tpu as pltpu


def _round_up(v, m):
    return -(-v // m) * m


def _dwconv_kernel(w_ref, b_ref, x_ref, o_ref, *, mult, K, s, Wph, HWv, HWp, CCH):
    # w_ref: (CB, mult*K*K) f32   -- w[ci, m*T + kh*K + kw]
    # b_ref: (CB, mult)     f32
    # x_ref: (1, s*s, CB, L)      -- stride-phase planes, lanes = flat (Hph*Wph)+1
    # o_ref: (1, CB, mult*HWp)    -- lane-dense; multiplier m stored at offset m*HWp
    T = K * K
    CB = w_ref.shape[0]
    n_chunks = CB // CCH

    def chunk(c0):
        # Params + the s*s phase planes for this channel chunk (loaded/cast once).
        w = w_ref[pl.ds(c0, CCH), :].astype(jnp.float32)            # (CCH, mult*T)
        b = b_ref[pl.ds(c0, CCH), :].astype(jnp.float32)            # (CCH, mult)
        planes = [x_ref[0, ph, pl.ds(c0, CCH), :].astype(jnp.float32)
                  for ph in range(s * s)]                           # (CCH, L) each

        # f32 accumulators live in vregs across all K*K taps; bias folded in.
        accs = [jnp.broadcast_to(b[:, m:m + 1], (CCH, HWv)) for m in range(mult)]
        for kh in range(K):
            for kw in range(K):
                ph = (kh % s) * s + (kw % s)        # stride-phase plane
                d = (kh // s) * Wph + (kw // s)     # in-plane flat lane shift
                t = kh * K + kw
                tap = planes[ph][:, d:d + HWv]      # (CCH, HWv) unit-stride slice
                for m in range(mult):
                    wv = w[:, m * T + t:m * T + t + 1]              # (CCH, 1)
                    accs[m] = accs[m] + wv * tap                    # VPU MAC
        # One lane-dense store per multiplier, 128-aligned start at m*HWp.
        for m in range(mult):
            o_ref[0, pl.ds(c0, CCH), m * HWp:m * HWp + HWv] = (
                accs[m].astype(o_ref.dtype))

    if n_chunks == 1:
        chunk(0)
    else:
        def body(ci, carry):
            chunk(pl.multiple_of(ci * CCH, CCH))
            return carry
        lax.fori_loop(0, n_chunks, body, 0)


def _vmem_capacity_bytes(default=64 * 1024 * 1024):
    try:
        return int(pltpu.get_tpu_info().vmem_capacity_bytes)
    except Exception:
        return default  # conservative (v7x physical VMEM)


def _pick_channel_block(c_in, n_batch, per_chan_bytes, per_buffer_budget):
    # Candidates: divisors of c_in that are multiples of 8 (or c_in itself).
    cands = sorted({d for d in range(1, c_in + 1)
                    if c_in % d == 0 and (d % 8 == 0 or d == c_in)})
    fitting = [d for d in cands if d * per_chan_bytes <= per_buffer_budget] or [cands[0]]
    cb = max(fitting)
    # v7x has 2 TensorCores: keep >= 2 parallel grid steps when possible.
    if n_batch * (c_in // cb) < 2:
        smaller = [d for d in fitting if n_batch * (c_in // d) >= 2]
        if smaller:
            cb = max(smaller)
    return cb


def _pick_chunk_rows(cb):
    # Rows per inner chunk: small enough that accs + cached planes fit 64 vregs.
    if cb % 8 == 0:
        return 8
    return max(d for d in range(1, min(cb, 24) + 1) if cb % d == 0)


def conv_head_pooling_forward(x, weight, bias, stride):
    """x: [N, C_in, H, W]; weight: [C_out, 1, K, K]; bias: [C_out] (zeros padding)."""
    N, C_in, H, W = x.shape
    C_out = weight.shape[0]
    assert C_out % C_in == 0, "groups=in_feature requires C_out % C_in == 0"
    mult = C_out // C_in
    s = int(stride)
    assert s >= 1
    K = s + 1
    p = s // 2
    # The phase-plane / phantom-column layout relies on these facts of the module.
    assert K == s + 1 and p == s // 2 and (K - 1) // s == 1
    assert weight.shape == (C_out, 1, K, K)

    Ho = (H + 2 * p - K) // s + 1
    Wo = (W + 2 * p - K) // s + 1
    T = K * K
    Hph, Wph = Ho + 1, Wo + 1           # phase-plane extent (tap shifts are 0 or 1)
    HWv = Ho * Wph                      # accumulator width (one phantom col per row)
    HWp = _round_up(HWv, 128)           # 128-aligned per-multiplier store stride
    L0 = Hph * Wph
    L = L0 + 1                          # +1 zero lane so the farthest tap stays in-bounds

    # --- layout glue: one fused pad + space-to-depth (no K*K blow-up). ---
    xp = jnp.pad(x, ((0, 0), (0, 0),
                     (p, s * Hph - H - p),
                     (p, s * Wph - W - p)))
    xph = xp.reshape(N, C_in, Hph, s, Wph, s).transpose(0, 3, 5, 1, 2, 4)
    xph = xph.reshape(N, s * s, C_in, L0)
    xph = jnp.pad(xph, ((0, 0), (0, 0), (0, 0), (0, L - L0)))   # (N, s*s, C_in, L)

    # Parameters stay f32 (tiny; avoids pre-quantizing when x is bf16).
    w2 = weight.astype(jnp.float32).reshape(C_in, mult * T)     # w2[ci, m*T + t]
    b2 = bias.astype(jnp.float32).reshape(C_in, mult)           # b2[ci, m]

    # --- block sizing from actual (in + out + params) x 2 pipeline buffers ---
    vmem_cap = _vmem_capacity_bytes()
    itemsize = x.dtype.itemsize
    per_chan = ((s * s * _round_up(L, 128)) * itemsize
                + (mult * HWp) * itemsize
                + (_round_up(mult * T, 128) + _round_up(mult, 128)) * 4)
    CB = _pick_channel_block(C_in, N, per_chan, per_buffer_budget=vmem_cap // 4)
    CCH = _pick_chunk_rows(CB)
    grid = (N, C_in // CB)

    out_flat = pl.pallas_call(
        functools.partial(_dwconv_kernel, mult=mult, K=K, s=s, Wph=Wph,
                          HWv=HWv, HWp=HWp, CCH=CCH),
        out_shape=jax.ShapeDtypeStruct((N, C_in, mult * HWp), x.dtype),
        grid=grid,
        in_specs=[
            pl.BlockSpec((CB, mult * T), lambda n, c: (c, 0)),
            pl.BlockSpec((CB, mult), lambda n, c: (c, 0)),
            pl.BlockSpec((1, s * s, CB, L), lambda n, c: (n, 0, c, 0)),
        ],
        out_specs=pl.BlockSpec((1, CB, mult * HWp), lambda n, c: (n, c, 0)),
        compiler_params=pltpu.CompilerParams(
            dimension_semantics=("parallel", "parallel"),
            vmem_limit_bytes=min(int(vmem_cap * 3 // 4), 128 * 1024 * 1024),
            # Let XLA fuse the pad/space-to-depth producer into the x operand.
            allow_input_fusion=[False, False, True],
        ),
    )(w2, b2, xph)

    # Drop pad lanes + phantom column: reshapes are free; the two slices fuse
    # into the single trailing copy (oc = ci*mult + m ordering matches PyTorch).
    out = out_flat.reshape(N, C_in, mult, HWp)[..., :HWv]
    out = out.reshape(N, C_out, Ho, Wph)[..., :Wo]
    return out


if __name__ == "__main__":
    key = jax.random.PRNGKey(0)
    k1, k2, k3 = jax.random.split(key, 3)

    # small shapes consistent with the module
    N, C_in, H, W = 2, 4, 16, 16
    stride = 2                       # -> kernel_size=3, padding=1
    C_out = 8                        # multiple of in_feature (groups=in_feature)
    K = stride + 1

    x = jax.random.normal(k1, (N, C_in, H, W), dtype=jnp.float32)
    weight = 0.1 * jax.random.normal(k2, (C_out, 1, K, K), dtype=jnp.float32)
    bias = 0.1 * jax.random.normal(k3, (C_out,), dtype=jnp.float32)

    out = conv_head_pooling_forward(x, weight, bias, stride)
    out = jax.block_until_ready(out)

    # reference: grouped conv via XLA
    ref = lax.conv_general_dilated(
        x, weight,
        window_strides=(stride, stride),
        padding=((stride // 2, stride // 2), (stride // 2, stride // 2)),
        dimension_numbers=("NCHW", "OIHW", "NCHW"),
        feature_group_count=C_in,
    ) + bias[None, :, None, None]

    assert out.shape == ref.shape, (out.shape, ref.shape)
    assert jnp.allclose(out, ref, atol=1e-4, rtol=1e-4), \
        float(jnp.max(jnp.abs(out - ref)))
    print("KERNEL_OK")
</pallas_src>

<mosaic_0001>
module attributes {stable_mosaic.version = 11 : i64} {
  func.func @_dwconv_kernel(%arg0: i32, %arg1: i32, %arg2: memref<4x18xf32, #tpu.memory_space<vmem>>, %arg3: memref<4x2xf32, #tpu.memory_space<vmem>>, %arg4: memref<1x4x4x82xf32, #tpu.memory_space<vmem>>, %arg5: memref<1x4x256xf32, #tpu.memory_space<vmem>>) attributes {dimension_semantics = [#tpu.dimension_semantics<parallel>, #tpu.dimension_semantics<parallel>], iteration_bounds = array<i64: 2, 1>, scalar_prefetch = 0 : i64, scratch_operands = 0 : i64, tpu.core_type = #tpu.core_type<tc>, window_params = [{transform_indices = @transform_0, window_bounds = array<i64: 4, 18>}, {transform_indices = @transform_1, window_bounds = array<i64: 4, 2>}, {transform_indices = @transform_2, window_bounds = array<i64: 1, 4, 4, 82>}, {transform_indices = @transform_3, window_bounds = array<i64: 1, 4, 256>}]} {
    %c0 = arith.constant 0 : index
    %c0_0 = arith.constant 0 : index
    %0 = vector.load %arg2[%c0, %c0_0] : memref<4x18xf32, #tpu.memory_space<vmem>>, vector<4x18xf32>
    %c0_1 = arith.constant 0 : index
    %c0_2 = arith.constant 0 : index
    %1 = vector.load %arg3[%c0_1, %c0_2] : memref<4x2xf32, #tpu.memory_space<vmem>>, vector<4x2xf32>
    %c0_3 = arith.constant 0 : index
    %c0_4 = arith.constant 0 : index
    %c0_5 = arith.constant 0 : index
    %c0_6 = arith.constant 0 : index
    %2 = vector.load %arg4[%c0_3, %c0_4, %c0_5, %c0_6] : memref<1x4x4x82xf32, #tpu.memory_space<vmem>>, vector<1x1x4x82xf32>
    %3 = vector.shape_cast %2 : vector<1x1x4x82xf32> to vector<4x82xf32>
    %c0_7 = arith.constant 0 : index
    %c1 = arith.constant 1 : index
    %c0_8 = arith.constant 0 : index
    %c0_9 = arith.constant 0 : index
    %4 = vector.load %arg4[%c0_7, %c1, %c0_8, %c0_9] : memref<1x4x4x82xf32, #tpu.memory_space<vmem>>, vector<1x1x4x82xf32>
    %5 = vector.shape_cast %4 : vector<1x1x4x82xf32> to vector<4x82xf32>
    %c0_10 = arith.constant 0 : index
    %c2 = arith.constant 2 : index
    %c0_11 = arith.constant 0 : index
    %c0_12 = arith.constant 0 : index
    %6 = vector.load %arg4[%c0_10, %c2, %c0_11, %c0_12] : memref<1x4x4x82xf32, #tpu.memory_space<vmem>>, vector<1x1x4x82xf32>
    %7 = vector.shape_cast %6 : vector<1x1x4x82xf32> to vector<4x82xf32>
    %c0_13 = arith.constant 0 : index
    %c3 = arith.constant 3 : index
    %c0_14 = arith.constant 0 : index
    %c0_15 = arith.constant 0 : index
    %8 = vector.load %arg4[%c0_13, %c3, %c0_14, %c0_15] : memref<1x4x4x82xf32, #tpu.memory_space<vmem>>, vector<1x1x4x82xf32>
    %9 = vector.shape_cast %8 : vector<1x1x4x82xf32> to vector<4x82xf32>
    %10 = vector.extract_strided_slice %1 {offsets = [0, 0], sizes = [4, 1], strides = [1, 1]} : vector<4x2xf32> to vector<4x1xf32>
    %11 = vector.shape_cast %10 : vector<4x1xf32> to vector<4x1xf32>
    %12 = vector.broadcast %11 : vector<4x1xf32> to vector<4x72xf32>
    %13 = vector.extract_strided_slice %1 {offsets = [0, 1], sizes = [4, 1], strides = [1, 1]} : vector<4x2xf32> to vector<4x1xf32>
    %14 = vector.shape_cast %13 : vector<4x1xf32> to vector<4x1xf32>
    %15 = vector.broadcast %14 : vector<4x1xf32> to vector<4x72xf32>
    %16 = vector.extract_strided_slice %3 {offsets = [0, 0], sizes = [4, 72], strides = [1, 1]} : vector<4x82xf32> to vector<4x72xf32>
    %17 = vector.extract_strided_slice %0 {offsets = [0, 0], sizes = [4, 1], strides = [1, 1]} : vector<4x18xf32> to vector<4x1xf32>
    %18 = vector.broadcast %17 : vector<4x1xf32> to vector<4x72xf32>
    %19 = arith.mulf %18, %16 : vector<4x72xf32>
    %20 = arith.addf %12, %19 : vector<4x72xf32>
    %21 = vector.extract_strided_slice %0 {offsets = [0, 9], sizes = [4, 1], strides = [1, 1]} : vector<4x18xf32> to vector<4x1xf32>
    %22 = vector.broadcast %21 : vector<4x1xf32> to vector<4x72xf32>
    %23 = arith.mulf %22, %16 : vector<4x72xf32>
    %24 = arith.addf %15, %23 : vector<4x72xf32>
    %25 = vector.extract_strided_slice %5 {offsets = [0, 0], sizes = [4, 72], strides = [1, 1]} : vector<4x82xf32> to vector<4x72xf32>
    %26 = vector.extract_strided_slice %0 {offsets = [0, 1], sizes = [4, 1], strides = [1, 1]} : vector<4x18xf32> to vector<4x1xf32>
    %27 = vector.broadcast %26 : vector<4x1xf32> to vector<4x72xf32>
    %28 = arith.mulf %27, %25 : vector<4x72xf32>
    %29 = arith.addf %20, %28 : vector<4x72xf32>
    %30 = vector.extract_strided_slice %0 {offsets = [0, 10], sizes = [4, 1], strides = [1, 1]} : vector<4x18xf32> to vector<4x1xf32>
    %31 = vector.broadcast %30 : vector<4x1xf32> to vector<4x72xf32>
    %32 = arith.mulf %31, %25 : vector<4x72xf32>
    %33 = arith.addf %24, %32 : vector<4x72xf32>
    %34 = vector.extract_strided_slice %3 {offsets = [0, 1], sizes = [4, 72], strides = [1, 1]} : vector<4x82xf32> to vector<4x72xf32>
    %35 = vector.extract_strided_slice %0 {offsets = [0, 2], sizes = [4, 1], strides = [1, 1]} : vector<4x18xf32> to vector<4x1xf32>
    %36 = vector.broadcast %35 : vector<4x1xf32> to vector<4x72xf32>
    %37 = arith.mulf %36, %34 : vector<4x72xf32>
    %38 = arith.addf %29, %37 : vector<4x72xf32>
    %39 = vector.extract_strided_slice %0 {offsets = [0, 11], sizes = [4, 1], strides = [1, 1]} : vector<4x18xf32> to vector<4x1xf32>
    %40 = vector.broadcast %39 : vector<4x1xf32> to vector<4x72xf32>
    %41 = arith.mulf %40, %34 : vector<4x72xf32>
    %42 = arith.addf %33, %41 : vector<4x72xf32>
    %43 = vector.extract_strided_slice %7 {offsets = [0, 0], sizes = [4, 72], strides = [1, 1]} : vector<4x82xf32> to vector<4x72xf32>
    %44 = vector.extract_strided_slice %0 {offsets = [0, 3], sizes = [4, 1], strides = [1, 1]} : vector<4x18xf32> to vector<4x1xf32>
    %45 = vector.broadcast %44 : vector<4x1xf32> to vector<4x72xf32>
    %46 = arith.mulf %45, %43 : vector<4x72xf32>
    %47 = arith.addf %38, %46 : vector<4x72xf32>
    %48 = vector.extract_strided_slice %0 {offsets = [0, 12], sizes = [4, 1], strides = [1, 1]} : vector<4x18xf32> to vector<4x1xf32>
    %49 = vector.broadcast %48 : vector<4x1xf32> to vector<4x72xf32>
    %50 = arith.mulf %49, %43 : vector<4x72xf32>
    %51 = arith.addf %42, %50 : vector<4x72xf32>
    %52 = vector.extract_strided_slice %9 {offsets = [0, 0], sizes = [4, 72], strides = [1, 1]} : vector<4x82xf32> to vector<4x72xf32>
    %53 = vector.extract_strided_slice %0 {offsets = [0, 4], sizes = [4, 1], strides = [1, 1]} : vector<4x18xf32> to vector<4x1xf32>
    %54 = vector.broadcast %53 : vector<4x1xf32> to vector<4x72xf32>
    %55 = arith.mulf %54, %52 : vector<4x72xf32>
    %56 = arith.addf %47, %55 : vector<4x72xf32>
    %57 = vector.extract_strided_slice %0 {offsets = [0, 13], sizes = [4, 1], strides = [1, 1]} : vector<4x18xf32> to vector<4x1xf32>
    %58 = vector.broadcast %57 : vector<4x1xf32> to vector<4x72xf32>
    %59 = arith.mulf %58, %52 : vector<4x72xf32>
    %60 = arith.addf %51, %59 : vector<4x72xf32>
    %61 = vector.extract_strided_slice %7 {offsets = [0, 1], sizes = [4, 72], strides = [1, 1]} : vector<4x82xf32> to vector<4x72xf32>
    %62 = vector.extract_strided_slice %0 {offsets = [0, 5], sizes = [4, 1], strides = [1, 1]} : vector<4x18xf32> to vector<4x1xf32>
    %63 = vector.broadcast %62 : vector<4x1xf32> to vector<4x72xf32>
    %64 = arith.mulf %63, %61 : vector<4x72xf32>
    %65 = arith.addf %56, %64 : vector<4x72xf32>
    %66 = vector.extract_strided_slice %0 {offsets = [0, 14], sizes = [4, 1], strides = [1, 1]} : vector<4x18xf32> to vector<4x1xf32>
    %67 = vector.broadcast %66 : vector<4x1xf32> to vector<4x72xf32>
    %68 = arith.mulf %67, %61 : vector<4x72xf32>
    %69 = arith.addf %60, %68 : vector<4x72xf32>
    %70 = vector.extract_strided_slice %3 {offsets = [0, 9], sizes = [4, 72], strides = [1, 1]} : vector<4x82xf32> to vector<4x72xf32>
    %71 = vector.extract_strided_slice %0 {offsets = [0, 6], sizes = [4, 1], strides = [1, 1]} : vector<4x18xf32> to vector<4x1xf32>
    %72 = vector.broadcast %71 : vector<4x1xf32> to vector<4x72xf32>
    %73 = arith.mulf %72, %70 : vector<4x72xf32>
    %74 = arith.addf %65, %73 : vector<4x72xf32>
    %75 = vector.extract_strided_slice %0 {offsets = [0, 15], sizes = [4, 1], strides = [1, 1]} : vector<4x18xf32> to vector<4x1xf32>
    %76 = vector.broadcast %75 : vector<4x1xf32> to vector<4x72xf32>
    %77 = arith.mulf %76, %70 : vector<4x72xf32>
    %78 = arith.addf %69, %77 : vector<4x72xf32>
    %79 = vector.extract_strided_slice %5 {offsets = [0, 9], sizes = [4, 72], strides = [1, 1]} : vector<4x82xf32> to vector<4x72xf32>
    %80 = vector.extract_strided_slice %0 {offsets = [0, 7], sizes = [4, 1], strides = [1, 1]} : vector<4x18xf32> to vector<4x1xf32>
    %81 = vector.broadcast %80 : vector<4x1xf32> to vector<4x72xf32>
    %82 = arith.mulf %81, %79 : vector<4x72xf32>
    %83 = arith.addf %74, %82 : vector<4x72xf32>
    %84 = vector.extract_strided_slice %0 {offsets = [0, 16], sizes = [4, 1], strides = [1, 1]} : vector<4x18xf32> to vector<4x1xf32>
    %85 = vector.broadcast %84 : vector<4x1xf32> to vector<4x72xf32>
    %86 = arith.mulf %85, %79 : vector<4x72xf32>
    %87 = arith.addf %78, %86 : vector<4x72xf32>
    %88 = vector.extract_strided_slice %3 {offsets = [0, 10], sizes = [4, 72], strides = [1, 1]} : vector<4x82xf32> to vector<4x72xf32>
    %89 = vector.extract_strided_slice %0 {offsets = [0, 8], sizes = [4, 1], strides = [1, 1]} : vector<4x18xf32> to vector<4x1xf32>
    %90 = vector.broadcast %89 : vector<4x1xf32> to vector<4x72xf32>
    %91 = arith.mulf %90, %88 : vector<4x72xf32>
    %92 = arith.addf %83, %91 : vector<4x72xf32>
    %93 = vector.extract_strided_slice %0 {offsets = [0, 17], sizes = [4, 1], strides = [1, 1]} : vector<4x18xf32> to vector<4x1xf32>
    %94 = vector.broadcast %93 : vector<4x1xf32> to vector<4x72xf32>
    %95 = arith.mulf %94, %88 : vector<4x72xf32>
    %96 = arith.addf %87, %95 : vector<4x72xf32>
    %c0_16 = arith.constant 0 : index
    %c0_17 = arith.constant 0 : index
    %c0_18 = arith.constant 0 : index
    %97 = vector.load %arg5[%c0_16, %c0_17, %c0_18] : memref<1x4x256xf32, #tpu.memory_space<vmem>>, vector<1x4x72xf32>
    %98 = vector.shape_cast %97 : vector<1x4x72xf32> to vector<4x72xf32>
    %99 = vector.shape_cast %92 : vector<4x72xf32> to vector<1x4x72xf32>
    tpu.vector_store %arg5[%c0_16, %c0_17, %c0_18], %99 {strides = array<i32>} : memref<1x4x256xf32, #tpu.memory_space<vmem>>, vector<1x4x72xf32>,
    %c0_19 = arith.constant 0 : index
    %c0_20 = arith.constant 0 : index
    %c128 = arith.constant 128 : index
    %100 = vector.load %arg5[%c0_19, %c0_20, %c128] : memref<1x4x256xf32, #tpu.memory_space<vmem>>, vector<1x4x72xf32>
    %101 = vector.shape_cast %100 : vector<1x4x72xf32> to vector<4x72xf32>
    %102 = vector.shape_cast %96 : vector<4x72xf32> to vector<1x4x72xf32>
    tpu.vector_store %arg5[%c0_19, %c0_20, %c128], %102 {strides = array<i32>} : memref<1x4x256xf32, #tpu.memory_space<vmem>>, vector<1x4x72xf32>,
    return
  }
  func.func @transform_0(%arg0: i32, %arg1: i32) -> (i32, i32) {
    %c0_i32 = arith.constant 0 : i32
    %c0_i32_0 = arith.constant 0 : i32
    return %arg1, %c0_i32 : i32, i32
  }
  func.func @transform_1(%arg0: i32, %arg1: i32) -> (i32, i32) {
    %c0_i32 = arith.constant 0 : i32
    %c0_i32_0 = arith.constant 0 : i32
    return %arg1, %c0_i32 : i32, i32
  }
  func.func @transform_2(%arg0: i32, %arg1: i32) -> (i32, i32, i32, i32) {
    %c0_i32 = arith.constant 0 : i32
    %c0_i32_0 = arith.constant 0 : i32
    %c0_i32_1 = arith.constant 0 : i32
    return %arg0, %c0_i32, %arg1, %c0_i32_0 : i32, i32, i32, i32
  }
  func.func @transform_3(%arg0: i32, %arg1: i32) -> (i32, i32, i32) {
    %c0_i32 = arith.constant 0 : i32
    %c0_i32_0 = arith.constant 0 : i32
    return %arg0, %arg1, %c0_i32 : i32, i32, i32
  }
}

</mosaic_0001>

<llo_original>
// kernel: tpu_custom_call.1
$region0: #{tpu_custom_call.1}
  #allocation0 [shape = 'u32[]', space=smem, size = 0x4, offset = 0x4, fixed_abs, tag = 'smem constant byte address 0x4 - core index']
  #allocation1 [shape = 'u32[72,128]{1,0:T(1,128)}', space=vmem, size = 0x9000, scoped, tag = 'internal scratch']
  %s0 = inlined_call_operand.vmem [shape: f32[4,18], index: 0, kind: input, shape index: {}]
  %s1 = inlined_call_operand.vmem [shape: f32[4,2], index: 1, kind: input, shape index: {}]
  %s2 = inlined_call_operand.hbm [shape: f32[2,4,4,82], index: 2, kind: input, shape index: {}]
  %s3 = inlined_call_operand.hbm [shape: f32[2,4,256], index: 3, kind: output, shape index: {}]
  %s4 = sld [smem:[#allocation0]]
  $region49: #{tpu_custom_call.1} parent=0
    _
  %s6 = ssub.s32 1, %s4
  %s7 = scalar_select 0, %s6, %s4
  $region1: #{tpu_custom_call.1} parent=0
    #allocation2 [shape = 'u8[16384]{0}', space=vmem, size = 0x4000, scoped, tag = 'input window, operand 2']
    #allocation3 [shape = 's32[2]{0}', space=sflag, size = 0x8, scoped, tag = 'scoped memory for tpu_custom_call.1']
    #allocation4 [shape = 's32[2]{0}', space=sflag, size = 0x8, scoped, tag = 'scoped memory for tpu_custom_call.1']
    #allocation5 [shape = 'u8[8192]{0}', space=vmem, size = 0x2000, scoped, tag = 'output window, operand 0']
    %8 = vsyncpa [#allocation3], 0
    %s9 = scalar_lea.sflag [#allocation3], 1
    %10 = vsyncpa %s9, 0
    %11 = vsyncpa [#allocation4], 0
    %s12 = scalar_lea.sflag [#allocation4], 1
    %13 = vsyncpa %s12, 0
    loop: start=0, step=1, limit=4
    $region2: #{tpu_custom_call.1} parent=1 // loop_pre_header
      _
    $region3: #{tpu_custom_call.1} parent=1 // loop_header
      %s15 = sphi 0, %s19
      %p16 = scmp.ge.s32.totalorder %s15, 4
      %s22 = sphi 0, %s34
      %s23 = sphi 0, %s30
      %s24 = sphi 0, %s22
      %s25 = sphi 0, %s23
      %s26 = sphi 0, %s24
      %s27 = sphi 0, %s25
      %s37 = sphi 0, %s39
      %s40 = sphi 0, %s37
      %s41 = sphi 0, %s40
      %s57 = sphi 0, %s41
      %s63 = sphi 0, %s65
      %s66 = sphi 0, %s63
      %s67 = sphi 0, %s66
      %s83 = sphi 0, %s67
      %s91 = sphi 0, %s93
      %s94 = sphi 0, %s91
      %s95 = sphi 0, %s94
      %s111 = sphi 0, %s95
      %s119 = sphi 0, %s121
      %s122 = sphi 0, %s119
      %s123 = sphi 0, %s122
      %s139 = sphi 0, %s123
    $region4: #{tpu_custom_call.1} parent=1 // loop_header_branch
      %18 = sbr.rel (%p16) target = $region8
    $region5: #{tpu_custom_call.1} parent=1 // loop_body
      %s20 = ssub.s32 %s15, 1
      %s21 = ssub.s32 %s15, 2
      %s28 = sadd.s32 1, %s23
      %p29 = scmp.ge.s32.totalorder %s28, 1
      %s30 = scalar_select %p29, 0, %s28
      %s31 = sadd.s32 1, %s22
      %s32 = scalar_select %p29, %s31, %s22
      %p33 = scmp.ge.s32.totalorder %s32, 2
      %s34 = scalar_select %p33, 0, %s32
      %s35 = ssub.s32 %s23, %s30
      %p36 = scmp.eq.s32.totalorder %s35, 0
      %s38 = sadd.s32 %s37, 1
      %s39 = scalar_select %p36, %s37, %s38
      %p42 = pneg %p36
      %p43 = scmp.eq.s32.totalorder %s15, 1
      %p44 = por %p42, %p43
      %p45 = scmp.ne.s32.totalorder %s37, %s40
      %p46 = scmp.eq.s32.totalorder %s15, 0
      %p47 = por %p45, %p46
      %p48 = scmp.ne.s32.totalorder %s37, %s40
      %p49 = scmp.eq.s32.totalorder %s20, 1
      %p50 = por %p48, %p49
      %p51 = scmp.ne.s32.totalorder %s40, %s41
      %p52 = scmp.eq.s32.totalorder %s20, 0
      %p53 = por %p51, %p52
      %p54 = scmp.ne.s32.totalorder %s40, %s41
      %p55 = scmp.eq.s32.totalorder %s21, 1
      %p56 = por %p54, %p55
      %p58 = scmp.ne.s32.totalorder %s41, %s57
      %p59 = scmp.eq.s32.totalorder %s21, 0
      %p60 = por %p58, %p59
      %s61 = ssub.s32 %s23, %s30
      %p62 = scmp.eq.s32.totalorder %s61, 0
      %s64 = sadd.s32 %s63, 1
      %s65 = scalar_select %p62, %s63, %s64
      %p68 = pneg %p62
      %p69 = scmp.eq.s32.totalorder %s15, 1
      %p70 = por %p68, %p69
      %p71 = scmp.ne.s32.totalorder %s63, %s66
      %p72 = scmp.eq.s32.totalorder %s15, 0
      %p73 = por %p71, %p72
      %p74 = scmp.ne.s32.totalorder %s63, %s66
      %p75 = scmp.eq.s32.totalorder %s20, 1
      %p76 = por %p74, %p75
      %p77 = scmp.ne.s32.totalorder %s66, %s67
      %p78 = scmp.eq.s32.totalorder %s20, 0
      %p79 = por %p77, %p78
      %p80 = scmp.ne.s32.totalorder %s66, %s67
      %p81 = scmp.eq.s32.totalorder %s21, 1
      %p82 = por %p80, %p81
      %p84 = scmp.ne.s32.totalorder %s67, %s83
      %p85 = scmp.eq.s32.totalorder %s21, 0
      %p86 = por %p84, %p85
      %s87 = ssub.s32 %s22, %s34
      %s88 = ssub.s32 %s23, %s30
      %s89 = sor.u32 %s87, %s88
      %p90 = scmp.eq.s32.totalorder %s89, 0
      %s92 = sadd.s32 %s91, 1
      %s93 = scalar_select %p90, %s91, %s92
      %p96 = pneg %p90
      %p97 = scmp.eq.s32.totalorder %s15, 1
      %p98 = por %p96, %p97
      %p99 = scmp.ne.s32.totalorder %s91, %s94
      %p100 = scmp.eq.s32.totalorder %s15, 0
      %p101 = por %p99, %p100
      %p102 = scmp.ne.s32.totalorder %s91, %s94
      %p103 = scmp.eq.s32.totalorder %s20, 1
      %p104 = por %p102, %p103
      %p105 = scmp.ne.s32.totalorder %s94, %s95
      %p106 = scmp.eq.s32.totalorder %s20, 0
      %p107 = por %p105, %p106
      %p108 = scmp.ne.s32.totalorder %s94, %s95
      %p109 = scmp.eq.s32.totalorder %s21, 1
      %p110 = por %p108, %p109
      %p112 = scmp.ne.s32.totalorder %s95, %s111
      %p113 = scmp.eq.s32.totalorder %s21, 0
      %p114 = por %p112, %p113
      %s115 = ssub.s32 %s22, %s34
      %s116 = ssub.s32 %s23, %s30
      %s117 = sor.u32 %s115, %s116
      %p118 = scmp.eq.s32.totalorder %s117, 0
      %s120 = sadd.s32 %s119, 1
      %s121 = scalar_select %p118, %s119, %s120
      %p124 = pneg %p118
      %p125 = scmp.eq.s32.totalorder %s15, 1
      %p126 = por %p124, %p125
      %p127 = scmp.ne.s32.totalorder %s119, %s122
      %p128 = scmp.eq.s32.totalorder %s15, 0
      %p129 = por %p127, %p128
      %p130 = scmp.ne.s32.totalorder %s119, %s122
      %p131 = scmp.eq.s32.totalorder %s20, 1
      %p132 = por %p130, %p131
      %p133 = scmp.ne.s32.totalorder %s122, %s123
      %p134 = scmp.eq.s32.totalorder %s20, 0
      %p135 = por %p133, %p134
      %p136 = scmp.ne.s32.totalorder %s122, %s123
      %p137 = scmp.eq.s32.totalorder %s21, 1
      %p138 = por %p136, %p137
      %p140 = scmp.ne.s32.totalorder %s123, %s139
      %p141 = scmp.eq.s32.totalorder %s21, 0
      %p142 = por %p140, %p141
      %p143 = scmp.le.s32.totalorder 1, %s15
      %p144 = scmp.lt.s32.totalorder %s15, 3
      %p145 = pnand %p143, %p144
      %p146 = pneg %p145
      // Predicated region
      $region9: #{tpu_custom_call.1} parent=5 // pred_check
        _
      $region10: #{tpu_custom_call.1} parent=5 // pred_check_branch
        %148 = sbr.rel (%p145) target = $region12
      $region11: #{tpu_custom_call.1} parent=5 // pred_region
        %s149 = ssub.s32 %s15, 1
        // Predicated region
        $region13: #{tpu_custom_call.1} parent=11 // pred_check
          %p150 = pneg %p53
        $region14: #{tpu_custom_call.1} parent=11 // pred_check_branch
          %152 = sbr.rel (%p150) target = $region16
        $region15: #{tpu_custom_call.1} parent=11 // pred_region
          %p153 = scmp.lt.s32.totalorder %s25, 0
          %s154 = scalar_select %p153, %s25, 0
          %s155 = smul.addr %s154, 4
          %s156 = scalar_lea.vmem %s0, %s155
        $region16: #{tpu_custom_call.1} parent=11 // pred_fallthru
          _
        // Predicated region
        $region17: #{tpu_custom_call.1} parent=11 // pred_check
          %p157 = pneg %p79
        $region18: #{tpu_custom_call.1} parent=11 // pred_check_branch
          %159 = sbr.rel (%p157) target = $region20
        $region19: #{tpu_custom_call.1} parent=11 // pred_region
          %p160 = scmp.lt.s32.totalorder %s25, 0
          %s161 = scalar_select %p160, %s25, 0
          %s162 = smul.addr %s161, 4
          %s163 = scalar_lea.vmem %s1, %s162
        $region20: #{tpu_custom_call.1} parent=11 // pred_fallthru
          _
      $region12: #{tpu_custom_call.1} parent=5 // pred_fallthru
        _
      %p164 = scmp.lt.s32.totalorder %s15, 2
      // Predicated region
      $region21: #{tpu_custom_call.1} parent=5 // pred_check
        %p165 = pneg %p164
      $region22: #{tpu_custom_call.1} parent=5 // pred_check_branch
        %167 = sbr.rel (%p165) target = $region24
      $region23: #{tpu_custom_call.1} parent=5 // pred_region
        // Predicated region
        $region25: #{tpu_custom_call.1} parent=23 // pred_check
          %p168 = pneg %p101
        $region26: #{tpu_custom_call.1} parent=23 // pred_check_branch
          %170 = sbr.rel (%p168) target = $region28
        $region27: #{tpu_custom_call.1} parent=23 // pred_region
          %s171 = sand.u32 %s91, 1
          %s172 = scalar_lea.sflag [#allocation3], %s171
          %s173 = sand.u32 %s91, 1
          %s174 = smul.addr %s173, 16
          %s175 = scalar_lea.vmem [#allocation2], %s174
          %177 = vsyncadd %s172, 0
          %s178 = smul.addr %s22, 4
          %s179 = sadd.s32 %s23, %s178
          %s180 = smul.addr %s179, 4
          %s181 = scalar_lea.hbm %s2, %s180
          %s182 = sshll.u32 %s181, 4
          %s183 = int_to_ptr.hbm [resolvable:$true] %s182
          %s184 = sshll.u32 %s175, 4
          %s185 = int_to_ptr.vmem [resolvable:$true] %s184
          %190 = dma.hbm_to_vmem [thread:$0]  %s183, 256, %s185, %s172, 64, 64, 4
        $region28: #{tpu_custom_call.1} parent=23 // pred_fallthru
          _
      $region24: #{tpu_custom_call.1} parent=5 // pred_fallthru
        _
      %p191 = scmp.le.s32.totalorder 1, %s15
      %p192 = scmp.lt.s32.totalorder %s15, 3
      %p193 = pnand %p191, %p192
      %p194 = pneg %p193
      // Predicated region
      $region29: #{tpu_custom_call.1} parent=5 // pred_check
        _
      $region30: #{tpu_custom_call.1} parent=5 // pred_check_branch
        %196 = sbr.rel (%p193) target = $region32
      $region31: #{tpu_custom_call.1} parent=5 // pred_region
        %s197 = ssub.s32 %s15, 1
        %s198 = sand.u32 %s94, 1
        %s199 = scalar_lea.sflag [#allocation3], %s198
        %s200 = sand.u32 %s94, 1
        %s201 = smul.addr %s200, 16
        %s202 = scalar_lea.vmem [#allocation2], %s201
        // Predicated region
        $region33: #{tpu_custom_call.1} parent=31 // pred_check
          %p203 = pneg %p107
        $region34: #{tpu_custom_call.1} parent=31 // pred_check_branch
          %205 = sbr.rel (%p203) target = $region36
        $region35: #{tpu_custom_call.1} parent=31 // pred_region
          %207 = dma.done %s199, 256
        $region36: #{tpu_custom_call.1} parent=31 // pred_fallthru
          _
        %p208 = scmp.lt.s32.totalorder %s25, 0
        %s209 = scalar_select %p208, %s25, 0
        %s210 = smul.addr %s209, 4
        %s211 = scalar_lea.vmem %s0, %s210
        %p212 = pneg %p53
        %p213 = pneg %p50
        %p214 = scmp.lt.s32.totalorder %s25, 0
        %s215 = scalar_select %p214, %s25, 0
        %s216 = smul.addr %s215, 4
        %s217 = scalar_lea.vmem %s1, %s216
        %p218 = pneg %p79
        %p219 = pneg %p76
        %s220 = sand.u32 %s94, 1
        %s221 = scalar_lea.sflag [#allocation3], %s220
        %s222 = sand.u32 %s94, 1
        %s223 = smul.addr %s222, 16
        %s224 = scalar_lea.vmem [#allocation2], %s223
        %p225 = pneg %p107
        %p226 = pneg %p104
        %p227 = pneg %p135
        %p228 = pneg %p132
        %s229 = sand.u32 %s122, 1
        %s230 = scalar_lea.sflag [#allocation4], %s229
        %s231 = sand.u32 %s122, 1
        %s232 = smul.addr %s231, 8
        %s233 = scalar_lea.vmem [#allocation5], %s232
        %p234 = scmp.lt.s32.totalorder %s25, 0
        %s235 = scalar_select %p234, %s25, 0
        %s236 = smul.addr %s235, 4
        %s237 = scalar_lea.vmem %s0, %s236
        %p238 = scmp.lt.s32.totalorder %s25, 0
        %s239 = scalar_select %p238, %s25, 0
        %s240 = smul.addr %s239, 4
        %s241 = scalar_lea.vmem %s1, %s240
        %v242 = vld [vmem:[%s237] sm:$0xf]
        %v243 = vld [vmem:[%s241] sm:$0xf]
        %v244 = vld [vmem:[%s202] sm:$0xf]
        %s245 = scalar_lea.vmem %s202, 4 [#allocation2]
        %v246 = vld [vmem:[%s245] sm:$0xf]
        %s247 = scalar_lea.vmem %s202, 8 [#allocation2]
        %v248 = vld [vmem:[%s247] sm:$0xf]
        %s249 = scalar_lea.vmem %s202, 12 [#allocation2]
        %v250 = vld [vmem:[%s249] sm:$0xf]
        %252 = vset.pattern.permute.xlu0 0
        %253 = vperm.xlu0 %252, %v243
        %v254 = vpop.permute.xlu0 %253
        %256 = vset.pattern.permute.xlu0 1
        %257 = vperm.xlu0 %256, %v243
        %v258 = vpop.permute.xlu0 %257
        %261 = vset.pattern.permute.xlu0 0
        %262 = vperm.xlu0 %261, %v242
        %v263 = vpop.permute.xlu0 %262
        %v265 = vmul.f32 %v263, %v244
        %v266 = vadd.f32 %v254, %v265
        %267 = vset.pattern.permute.xlu0 9
        %268 = vperm.xlu0 %267, %v242
        %v269 = vpop.permute.xlu0 %268
        %v271 = vmul.f32 %v269, %v244
        %v272 = vadd.f32 %v258, %v271
        %273 = vset.pattern.permute.xlu0 1
        %274 = vperm.xlu0 %273, %v242
        %v275 = vpop.permute.xlu0 %274
        %v277 = vmul.f32 %v275, %v246
        %v278 = vadd.f32 %v266, %v277
        %279 = vset.pattern.permute.xlu0 10
        %280 = vperm.xlu0 %279, %v242
        %v281 = vpop.permute.xlu0 %280
        %v283 = vmul.f32 %v281, %v246
        %v284 = vadd.f32 %v272, %v283
        %285 = vset.pattern.permute.xlu0 2
        %286 = vperm.xlu0 %285, %v242
        %v287 = vpop.permute.xlu0 %286
        %v289 = vmul.f32 %v287, %v244
        %291 = vrot.lane.b32.xlu0 %v289, 127
        %v292 = vpop.permute.xlu0 %291
        %v294 = vadd.f32 %v278, %v292
        %295 = vset.pattern.permute.xlu0 11
        %296 = vperm.xlu0 %295, %v242
        %v297 = vpop.permute.xlu0 %296
        %v299 = vmul.f32 %v297, %v244
        %301 = vrot.lane.b32.xlu0 %v299, 127
        %v302 = vpop.permute.xlu0 %301
        %v304 = vadd.f32 %v284, %v302
        %305 = vset.pattern.permute.xlu0 3
        %306 = vperm.xlu0 %305, %v242
        %v307 = vpop.permute.xlu0 %306
        %v309 = vmul.f32 %v307, %v248
        %v310 = vadd.f32 %v294, %v309
        %311 = vset.pattern.permute.xlu0 12
        %312 = vperm.xlu0 %311, %v242
        %v313 = vpop.permute.xlu0 %312
        %v315 = vmul.f32 %v313, %v248
        %v316 = vadd.f32 %v304, %v315
        %317 = vset.pattern.permute.xlu0 4
        %318 = vperm.xlu0 %317, %v242
        %v319 = vpop.permute.xlu0 %318
        %v321 = vmul.f32 %v319, %v250
        %v322 = vadd.f32 %v310, %v321
        %323 = vset.pattern.permute.xlu0 13
        %324 = vperm.xlu0 %323, %v242
        %v325 = vpop.permute.xlu0 %324
        %v327 = vmul.f32 %v325, %v250
        %v328 = vadd.f32 %v316, %v327
        %329 = vset.pattern.permute.xlu0 5
        %330 = vperm.xlu0 %329, %v242
        %v331 = vpop.permute.xlu0 %330
        %v333 = vmul.f32 %v331, %v248
        %335 = vrot.lane.b32.xlu0 %v333, 127
        %v336 = vpop.permute.xlu0 %335
        %v338 = vadd.f32 %v322, %v336
        %339 = vset.pattern.permute.xlu0 14
        %340 = vperm.xlu0 %339, %v242
        %v341 = vpop.permute.xlu0 %340
        %v343 = vmul.f32 %v341, %v248
        %345 = vrot.lane.b32.xlu0 %v343, 127
        %v346 = vpop.permute.xlu0 %345
        %v348 = vadd.f32 %v328, %v346
        %349 = vset.pattern.permute.xlu0 6
        %350 = vperm.xlu0 %349, %v242
        %v351 = vpop.permute.xlu0 %350
        %v353 = vmul.f32 %v351, %v244
        %355 = vrot.lane.b32.xlu0 %v353, 119
        %v356 = vpop.permute.xlu0 %355
        %v358 = vadd.f32 %v338, %v356
        %359 = vset.pattern.permute.xlu0 15
        %360 = vperm.xlu0 %359, %v242
        %v361 = vpop.permute.xlu0 %360
        %v363 = vmul.f32 %v361, %v244
        %365 = vrot.lane.b32.xlu0 %v363, 119
        %v366 = vpop.permute.xlu0 %365
        %v368 = vadd.f32 %v348, %v366
        %369 = vset.pattern.permute.xlu0 7
        %370 = vperm.xlu0 %369, %v242
        %v371 = vpop.permute.xlu0 %370
        %v373 = vmul.f32 %v371, %v246
        %375 = vrot.lane.b32.xlu0 %v373, 119
        %v376 = vpop.permute.xlu0 %375
        %v378 = vadd.f32 %v358, %v376
        %379 = vset.pattern.permute.xlu0 16
        %380 = vperm.xlu0 %379, %v242
        %v381 = vpop.permute.xlu0 %380
        %v383 = vmul.f32 %v381, %v246
        %385 = vrot.lane.b32.xlu0 %v383, 119
        %v386 = vpop.permute.xlu0 %385
        %v388 = vadd.f32 %v368, %v386
        %389 = vset.pattern.permute.xlu0 8
        %390 = vperm.xlu0 %389, %v242
        %v391 = vpop.permute.xlu0 %390
        %v393 = vmul.f32 %v391, %v244
        %395 = vrot.lane.b32.xlu0 %v393, 118
        %v396 = vpop.permute.xlu0 %395
        %v398 = vadd.f32 %v378, %v396
        %399 = vset.pattern.permute.xlu0 17
        %400 = vperm.xlu0 %399, %v242
        %v401 = vpop.permute.xlu0 %400
        %v403 = vmul.f32 %v401, %v244
        %405 = vrot.lane.b32.xlu0 %v403, 118
        %v406 = vpop.permute.xlu0 %405
        %v408 = vadd.f32 %v388, %v406
        %vm409 = vcmask 584704
        %410 = vst.msk [vmem:[%s233] sm:$0xf] %vm409, %v398
        %411 = vst.msk [vmem:[%s233 + $0x4] sm:$0xf] %vm409, %v408
        %s412 = sand.u32 %s122, 1
        %s413 = scalar_lea.sflag [#allocation4], %s412
        %s414 = sand.u32 %s122, 1
        %s415 = smul.addr %s414, 8
        %s416 = scalar_lea.vmem [#allocation5], %s415
        // Predicated region
        $region37: #{tpu_custom_call.1} parent=31 // pred_check
          %p417 = pneg %p132
        $region38: #{tpu_custom_call.1} parent=31 // pred_check_branch
          %419 = sbr.rel (%p417) target = $region40
        $region39: #{tpu_custom_call.1} parent=31 // pred_region
          %421 = vsyncadd %s413, 0
          %s422 = smul.addr %s25, 2
          %s423 = smul.addr %s24, 2
          %s424 = sadd.s32 %s422, %s423
          %s425 = smul.addr %s424, 4
          %s426 = scalar_lea.hbm %s3, %s425
          %s428 = sshll.u32 %s416, 4
          %s429 = int_to_ptr.vmem [resolvable:$true] %s428
          %s430 = sshll.u32 %s426, 4
          %s431 = int_to_ptr.hbm [resolvable:$true] %s430
          %433 = dma.vmem_to_hbm [thread:$0]  %s429, 128, %s431, %s413
        $region40: #{tpu_custom_call.1} parent=31 // pred_fallthru
          _
      $region32: #{tpu_custom_call.1} parent=5 // pred_fallthru
        _
      %p434 = scmp.le.s32.totalorder 2, %s15
      // Predicated region
      $region41: #{tpu_custom_call.1} parent=5 // pred_check
        %p435 = pneg %p434
      $region42: #{tpu_custom_call.1} parent=5 // pred_check_branch
        %437 = sbr.rel (%p435) target = $region44
      $region43: #{tpu_custom_call.1} parent=5 // pred_region
        %s438 = ssub.s32 %s15, 2
        // Predicated region
        $region45: #{tpu_custom_call.1} parent=43 // pred_check
          %p439 = pneg %p138
        $region46: #{tpu_custom_call.1} parent=43 // pred_check_branch
          %441 = sbr.rel (%p439) target = $region48
        $region47: #{tpu_custom_call.1} parent=43 // pred_region
          %s442 = sand.u32 %s123, 1
          %s443 = scalar_lea.sflag [#allocation4], %s442
          %s444 = sand.u32 %s123, 1
          %s445 = smul.addr %s444, 8
          %s446 = scalar_lea.vmem [#allocation5], %s445
          %448 = dma.done %s443, 128
        $region48: #{tpu_custom_call.1} parent=43 // pred_fallthru
          _
      $region44: #{tpu_custom_call.1} parent=5 // pred_fallthru
        _
    $region6: #{tpu_custom_call.1} parent=1 // loop_footer
      %s19 = sadd.s32 1, %s15
    $region7: #{tpu_custom_call.1} parent=1 // loop_footer_branch
      %14 = sbr.rel target = $region3
    $region8: #{tpu_custom_call.1} parent=1 // loop_exit
      _
    %449 = vsyncpa [#allocation3], 1
    %s450 = scalar_lea.sflag [#allocation3], 1
    %451 = vsyncpa %s450, 1
    %452 = vsyncpa [#allocation4], 1
    %s453 = scalar_lea.sflag [#allocation4], 1
    %454 = vsyncpa %s453, 1

</llo_original>
